<compile_context>
chip_gen: v7x
topology: tpu7x:2x2x1
jax: 0.10.0
libtpu: 0.0.40
codegen_flags: <defaults>
</compile_context>

<pallas_src>
import functools

import jax
import jax.numpy as jnp
from jax import lax
from jax.experimental import pallas as pl
from jax.experimental.pallas import tpu as pltpu


# ----------------------------------------------------------------------------
# VMEM budgeting / tile selection helpers (trace-time Python only).
# ----------------------------------------------------------------------------

def _vmem_budget_bytes():
    """Per-core VMEM budget: ~7/8 of physical capacity (generation-aware)."""
    try:
        cap = int(pltpu.get_tpu_info().vmem_capacity_bytes)
    except Exception:
        cap = 64 * 1024 * 1024  # conservative fallback (v7x per-core size)
    return (cap // 8) * 7       # leave headroom for compiler scratch


def _pick_tile(n, max_tile, mult=8):
    """Largest divisor of n that is <= max_tile and a multiple of `mult`
    (or n itself).  Returning a divisor keeps grids exact; returning a multiple
    of `mult` (or the full dim) keeps the (8,128) block constraint satisfied."""
    max_tile = max(1, min(n, int(max_tile)))
    for t in range(max_tile, 0, -1):
        if n % t == 0 and (t % mult == 0 or t == n):
            return t
    return n


# Live f32 (TM, TN) temporaries in kernel 2: xg, sim, e, iota/diff, where results.
_TEMPS = 6


def _plan_kernel2(two_b, d, budget):
    """Choose (TM, TN) for the similarity/loss kernel from the VMEM budget."""
    bpf = 4  # f32 bytes

    def tm_cap(tn, col_bufs):
        fixed = tn * d * bpf * col_bufs       # z column tile(s)
        fixed += tn * bpf * col_bufs          # col_sq tile(s)
        avail = budget - fixed
        if avail <= 0:
            return 0
        per_row = 2 * d * bpf                 # (TM, D) row tile, double-buffered
        per_row += _TEMPS * tn * bpf          # (TM, TN) f32 temporaries
        per_row += 16 * bpf                   # row_sq / out blocks + 3 accumulators
        return avail // per_row

    min_tm = min(two_b, 8)

    # 1) Preferred: keep z fully VMEM-resident (single column step, single-buffered).
    cap = tm_cap(two_b, col_bufs=1)
    if cap >= min_tm:
        # Keep >= 2 row tiles when possible so the "parallel" axis can shard
        # across v7x's two TensorCores; cap TM at 1024 (overhead already amortized).
        tm = _pick_tile(two_b, min(int(cap), max(two_b // 2, min_tm), 1024), mult=8)
        return tm, two_b

    # 2) Column tiling: 2B*D too large to keep resident on this generation.
    for tn_try in (1024, 512, 256, 128):
        if tn_try > two_b:
            continue
        tn = _pick_tile(two_b, tn_try, mult=128)   # mult=128 keeps col_sq lane-tiled
        cap = tm_cap(tn, col_bufs=2)
        if cap >= min_tm:
            tm = _pick_tile(two_b, min(int(cap), 1024), mult=8)
            return tm, tn

    # 3) Last resort: smallest tiles (may spill, still correct).
    return _pick_tile(two_b, 8, mult=8), _pick_tile(two_b, 128, mult=128)


# ----------------------------------------------------------------------------
# Kernel 1: L2-normalize rows of emb_i / emb_j, pack into (2, B, D), and emit
# the squared norms of the *normalized* rows (the xp1/xp2 terms of the module).
# ----------------------------------------------------------------------------

def _normalize_kernel(emb_i_ref, emb_j_ref, z_ref, sq_ref):
    # F.normalize clamps ||x|| at eps=1e-12  ->  clamp ||x||^2 at eps^2 = 1e-24.
    eps2 = jnp.float32(1e-24)

    def _norm(x):
        x = x.astype(jnp.float32)
        ss = jnp.sum(x * x, axis=1, keepdims=True)
        zn = x * lax.rsqrt(jnp.maximum(ss, eps2))      # rsqrt -> EUP, mul -> VPU
        # torch.pow(z,2).sum(dim=1) of the normalized rows (computed once here,
        # reused by kernel 2 as both row_sq and col_sq -> no per-step recompute).
        return zn, jnp.sum(zn * zn, axis=1, keepdims=True)

    zi, si = _norm(emb_i_ref[...])
    zj, sj = _norm(emb_j_ref[...])
    z_ref[0] = zi
    z_ref[1] = zj
    sq_ref[0] = si
    sq_ref[1] = sj


# ----------------------------------------------------------------------------
# Kernel 2: row/col tiled similarity block + masked loss with accumulators.
# Grid = (row tiles [parallel], col tiles [arbitrary, last]).
# ----------------------------------------------------------------------------

def _sim_loss_kernel(row_sq_ref, z_rows_ref, col_sq_ref, z_cols_ref, o_ref,
                     nom_acc, pos_acc, den_acc, *, batch_size, temperature):
    i = pl.program_id(0)
    j = pl.program_id(1)
    tm = z_rows_ref.shape[0]
    tn = z_cols_ref.shape[0]

    @pl.when(j == 0)
    def _():
        nom_acc[...] = jnp.zeros_like(nom_acc)
        pos_acc[...] = jnp.zeros_like(pos_acc)
        den_acc[...] = jnp.zeros_like(den_acc)

    z_rows = z_rows_ref[...]                      # (TM, D) f32
    z_cols = z_cols_ref[...]                      # (TN, D) f32

    # Gram block on the MXU; contracting dim 1 on both sides avoids a transpose.
    xg = lax.dot_general(
        z_rows, z_cols,
        dimension_numbers=(((1,), (1,)), ((), ())),
        preferred_element_type=jnp.float32)       # (TM, TN)

    # similarity = xp1 + xp2 - xg  (the module's quirky "similarity").
    sim = (row_sq_ref[...] - xg) + col_sq_ref[...]            # (TM,1)+(1,TN) bcast

    # Masks from a single global row-col difference (no modulo, no float masks).
    row0 = i * tm
    col0 = j * tn
    rows = lax.broadcasted_iota(jnp.int32, (tm, tn), 0) + row0
    cols = lax.broadcasted_iota(jnp.int32, (tm, tn), 1) + col0
    diff = rows - cols
    pos_mask = (diff == batch_size) | (diff == -batch_size)   # the positive pair
    neg_mask = jnp.logical_not(pos_mask | (diff == 0))        # all but diag & positive

    inv_t = jnp.float32(1.0 / temperature)
    e = jnp.exp(sim * inv_t)                                   # EUP

    nom_acc[...] += jnp.sum(jnp.where(pos_mask, e, 0.0), axis=1, keepdims=True)
    pos_acc[...] += jnp.sum(jnp.where(pos_mask, sim, 0.0), axis=1, keepdims=True)
    den_acc[...] += jnp.sum(jnp.where(neg_mask, e, 0.0), axis=1, keepdims=True)

    @pl.when(j == pl.num_programs(1) - 1)
    def _():
        # NOTE: exact reciprocal (approx=True would exceed the 1e-5 tolerance),
        # and exp(positives) intentionally has NO /temperature (module quirk).
        inv_den = pl.reciprocal(den_acc[...])
        o_ref[...] = -jnp.log(nom_acc[...] * inv_den + jnp.exp(pos_acc[...]))


# ----------------------------------------------------------------------------
# Wrapper
# ----------------------------------------------------------------------------

def contrastive_loss(emb_i, emb_j, temperature=0.7):
    """Pallas TPU implementation of ContrastiveLoss.forward(emb_i, emb_j)."""
    assert emb_i.shape == emb_j.shape and emb_i.ndim == 2
    B, D = emb_i.shape
    two_b = 2 * B
    budget = _vmem_budget_bytes()

    # ---- Kernel 1: normalize + pack + per-row squared norms (one pass). ----
    # VMEM per step ~ 40 * tb * D bytes (two dbl-buffered inputs, dbl-buffered
    # packed output, temporaries) -> budget tb instead of divisibility only.
    tb = _pick_tile(B, max(budget // (40 * D), 1), mult=8)
    z, sq = pl.pallas_call(
        _normalize_kernel,
        out_shape=(jax.ShapeDtypeStruct((2, B, D), jnp.float32),
                   jax.ShapeDtypeStruct((2, B, 1), jnp.float32)),
        grid_spec=pltpu.PrefetchScalarGridSpec(
            num_scalar_prefetch=0,
            grid=(B // tb,),
            in_specs=[pl.BlockSpec((tb, D), lambda i: (i, 0)),
                      pl.BlockSpec((tb, D), lambda i: (i, 0))],
            out_specs=[pl.BlockSpec((2, tb, D), lambda i: (0, i, 0)),
                       pl.BlockSpec((2, tb, 1), lambda i: (0, i, 0))],
        ),
        compiler_params=pltpu.CompilerParams(
            dimension_semantics=("parallel",),
            vmem_limit_bytes=budget,
        ),
    )(emb_i, emb_j)
    z = z.reshape(two_b, D)            # contiguous -> free
    row_sq = sq.reshape(two_b, 1)      # contiguous -> free
    col_sq = sq.reshape(1, two_b)      # tiny (2B floats) relayout outside kernels

    # ---- Kernel 2: tiled similarity + masked loss. ----
    tm, tn = _plan_kernel2(two_b, D, budget)
    n_rows = two_b // tm
    n_cols = two_b // tn
    resident = (n_cols == 1)           # z fully VMEM-resident (constant col block)

    def _call_k2(single_buffer_resident):
        # Single-buffer the never-changing resident blocks to reclaim VMEM
        # (default double-buffering would hold two identical copies).
        extra = ({"pipeline_mode": pl.Buffered(1)}
                 if (resident and single_buffer_resident) else {})
        kernel = functools.partial(
            _sim_loss_kernel, batch_size=B, temperature=float(temperature))
        return pl.pallas_call(
            kernel,
            out_shape=jax.ShapeDtypeStruct((two_b, 1), jnp.float32),
            grid_spec=pltpu.PrefetchScalarGridSpec(
                num_scalar_prefetch=0,
                grid=(n_rows, n_cols),
                in_specs=[
                    pl.BlockSpec((tm, 1), lambda i, j: (i, 0)),            # row norms
                    pl.BlockSpec((tm, D), lambda i, j: (i, 0)),            # z row tile
                    pl.BlockSpec((1, tn), lambda i, j: (0, j), **extra),   # col norms
                    pl.BlockSpec((tn, D), lambda i, j: (j, 0), **extra),   # z col tile
                ],
                out_specs=pl.BlockSpec((tm, 1), lambda i, j: (i, 0)),
                scratch_shapes=[pltpu.VMEM((tm, 1), jnp.float32)] * 3,
            ),
            compiler_params=pltpu.CompilerParams(
                dimension_semantics=("parallel", "arbitrary"),
                vmem_limit_bytes=budget,
            ),
        )(row_sq, z, col_sq, z)

    try:
        loss_rows = _call_k2(True)
    except Exception:
        # Fallback if this JAX build rejects pipeline_mode=pl.Buffered(1);
        # semantics are identical, only the resident block is double-buffered.
        loss_rows = _call_k2(False)

    # Final tiny reduction (2B scalars) + normalization in the wrapper.
    return jnp.sum(loss_rows) / jnp.float32(two_b)


# ----------------------------------------------------------------------------
# Pure-JAX reference mirroring the PyTorch forward, for verification.
# ----------------------------------------------------------------------------

def _reference_loss(emb_i, emb_j, temperature=0.7):
    B = emb_i.shape[0]
    eps = 1e-12
    zi = emb_i / jnp.maximum(jnp.linalg.norm(emb_i, axis=1, keepdims=True), eps)
    zj = emb_j / jnp.maximum(jnp.linalg.norm(emb_j, axis=1, keepdims=True), eps)
    x = jnp.concatenate([zi, zj], axis=0)
    xp = jnp.sum(x ** 2, axis=1, keepdims=True)
    sim = xp + xp.T - x @ x.T
    sim_ij = jnp.diagonal(sim, offset=B)
    sim_ji = jnp.diagonal(sim, offset=-B)
    positives = jnp.concatenate([sim_ij, sim_ji], axis=0)
    row = jnp.arange(2 * B)[:, None]
    col = jnp.arange(2 * B)[None, :]
    neg_mask = ((row % B) != (col % B)).astype(jnp.float32)
    nominator = jnp.exp(positives / temperature)
    denominator = jnp.sum(neg_mask * jnp.exp(sim / temperature), axis=1)
    lp = -jnp.log(nominator / denominator + jnp.exp(positives))
    return jnp.sum(lp) / (2 * B)


if __name__ == "__main__":
    B, D = 4, 32          # batch_size=4 -> similarity matrix is (8, 8); hidden=32
    temperature = 0.7

    key = jax.random.PRNGKey(0)
    k_i, k_j = jax.random.split(key)
    emb_i = jax.random.normal(k_i, (B, D), dtype=jnp.float32)
    emb_j = jax.random.normal(k_j, (B, D), dtype=jnp.float32)

    loss = jax.block_until_ready(contrastive_loss(emb_i, emb_j, temperature))
    ref = jax.block_until_ready(_reference_loss(emb_i, emb_j, temperature))
    assert jnp.allclose(loss, ref, rtol=1e-5, atol=1e-5), (loss, ref)

    print("KERNEL_OK")
</pallas_src>

<mosaic_0001>
module attributes {stable_mosaic.version = 11 : i64} {
  func.func @_normalize_kernel(%arg0: i32, %arg1: memref<4x32xf32, #tpu.memory_space<vmem>>, %arg2: memref<4x32xf32, #tpu.memory_space<vmem>>, %arg3: memref<2x4x32xf32, #tpu.memory_space<vmem>>, %arg4: memref<2x4x1xf32, #tpu.memory_space<vmem>>) attributes {dimension_semantics = [#tpu.dimension_semantics<parallel>], iteration_bounds = array<i64: 1>, scalar_prefetch = 0 : i64, scratch_operands = 0 : i64, tpu.core_type = #tpu.core_type<tc>, window_params = [{transform_indices = @transform_0, window_bounds = array<i64: 4, 32>}, {transform_indices = @transform_1, window_bounds = array<i64: 4, 32>}, {transform_indices = @transform_2, window_bounds = array<i64: 2, 4, 32>}, {transform_indices = @transform_3, window_bounds = array<i64: 2, 4, 1>}]} {
    %c0 = arith.constant 0 : index
    %c0_0 = arith.constant 0 : index
    %0 = vector.load %arg1[%c0, %c0_0] : memref<4x32xf32, #tpu.memory_space<vmem>>, vector<4x32xf32>
    %1 = arith.mulf %0, %0 : vector<4x32xf32>
    %cst = arith.constant dense<0.000000e+00> : vector<4xf32>
    %2 = vector.multi_reduction <add>, %1, %cst [1] : vector<4x32xf32> to vector<4xf32>
    %3 = vector.shape_cast %2 : vector<4xf32> to vector<4x1xf32>
    %cst_1 = arith.constant 1.000000e-24 : f32
    %4 = vector.broadcast %cst_1 : f32 to vector<4x1xf32>
    %5 = arith.maximumf %3, %4 : vector<4x1xf32>
    %6 = math.rsqrt %5 : vector<4x1xf32>
    %7 = vector.broadcast %6 : vector<4x1xf32> to vector<4x32xf32>
    %8 = arith.mulf %0, %7 : vector<4x32xf32>
    %9 = arith.mulf %8, %8 : vector<4x32xf32>
    %cst_2 = arith.constant dense<0.000000e+00> : vector<4xf32>
    %10 = vector.multi_reduction <add>, %9, %cst_2 [1] : vector<4x32xf32> to vector<4xf32>
    %11 = vector.shape_cast %10 : vector<4xf32> to vector<4x1xf32>
    %c0_3 = arith.constant 0 : index
    %c0_4 = arith.constant 0 : index
    %12 = vector.load %arg2[%c0_3, %c0_4] : memref<4x32xf32, #tpu.memory_space<vmem>>, vector<4x32xf32>
    %13 = arith.mulf %12, %12 : vector<4x32xf32>
    %cst_5 = arith.constant dense<0.000000e+00> : vector<4xf32>
    %14 = vector.multi_reduction <add>, %13, %cst_5 [1] : vector<4x32xf32> to vector<4xf32>
    %15 = vector.shape_cast %14 : vector<4xf32> to vector<4x1xf32>
    %cst_6 = arith.constant 1.000000e-24 : f32
    %16 = vector.broadcast %cst_6 : f32 to vector<4x1xf32>
    %17 = arith.maximumf %15, %16 : vector<4x1xf32>
    %18 = math.rsqrt %17 : vector<4x1xf32>
    %19 = vector.broadcast %18 : vector<4x1xf32> to vector<4x32xf32>
    %20 = arith.mulf %12, %19 : vector<4x32xf32>
    %21 = arith.mulf %20, %20 : vector<4x32xf32>
    %cst_7 = arith.constant dense<0.000000e+00> : vector<4xf32>
    %22 = vector.multi_reduction <add>, %21, %cst_7 [1] : vector<4x32xf32> to vector<4xf32>
    %23 = vector.shape_cast %22 : vector<4xf32> to vector<4x1xf32>
    %c0_8 = arith.constant 0 : index
    %c0_9 = arith.constant 0 : index
    %c0_10 = arith.constant 0 : index
    %24 = vector.load %arg3[%c0_8, %c0_9, %c0_10] : memref<2x4x32xf32, #tpu.memory_space<vmem>>, vector<1x4x32xf32>
    %25 = vector.shape_cast %24 : vector<1x4x32xf32> to vector<4x32xf32>
    %26 = vector.shape_cast %8 : vector<4x32xf32> to vector<1x4x32xf32>
    tpu.vector_store %arg3[%c0_8, %c0_9, %c0_10], %26 {strides = array<i32>} : memref<2x4x32xf32, #tpu.memory_space<vmem>>, vector<1x4x32xf32>,
    %c1 = arith.constant 1 : index
    %c0_11 = arith.constant 0 : index
    %c0_12 = arith.constant 0 : index
    %27 = vector.load %arg3[%c1, %c0_11, %c0_12] : memref<2x4x32xf32, #tpu.memory_space<vmem>>, vector<1x4x32xf32>
    %28 = vector.shape_cast %27 : vector<1x4x32xf32> to vector<4x32xf32>
    %29 = vector.shape_cast %20 : vector<4x32xf32> to vector<1x4x32xf32>
    tpu.vector_store %arg3[%c1, %c0_11, %c0_12], %29 {strides = array<i32>} : memref<2x4x32xf32, #tpu.memory_space<vmem>>, vector<1x4x32xf32>,
    %c0_13 = arith.constant 0 : index
    %c0_14 = arith.constant 0 : index
    %c0_15 = arith.constant 0 : index
    %30 = vector.load %arg4[%c0_13, %c0_14, %c0_15] : memref<2x4x1xf32, #tpu.memory_space<vmem>>, vector<1x4x1xf32>
    %31 = vector.shape_cast %30 : vector<1x4x1xf32> to vector<4x1xf32>
    %32 = vector.shape_cast %11 : vector<4x1xf32> to vector<1x4x1xf32>
    tpu.vector_store %arg4[%c0_13, %c0_14, %c0_15], %32 {strides = array<i32>} : memref<2x4x1xf32, #tpu.memory_space<vmem>>, vector<1x4x1xf32>,
    %c1_16 = arith.constant 1 : index
    %c0_17 = arith.constant 0 : index
    %c0_18 = arith.constant 0 : index
    %33 = vector.load %arg4[%c1_16, %c0_17, %c0_18] : memref<2x4x1xf32, #tpu.memory_space<vmem>>, vector<1x4x1xf32>
    %34 = vector.shape_cast %33 : vector<1x4x1xf32> to vector<4x1xf32>
    %35 = vector.shape_cast %23 : vector<4x1xf32> to vector<1x4x1xf32>
    tpu.vector_store %arg4[%c1_16, %c0_17, %c0_18], %35 {strides = array<i32>} : memref<2x4x1xf32, #tpu.memory_space<vmem>>, vector<1x4x1xf32>,
    return
  }
  func.func @transform_0(%arg0: i32) -> (i32, i32) {
    %c0_i32 = arith.constant 0 : i32
    %c0_i32_0 = arith.constant 0 : i32
    return %arg0, %c0_i32 : i32, i32
  }
  func.func @transform_1(%arg0: i32) -> (i32, i32) {
    %c0_i32 = arith.constant 0 : i32
    %c0_i32_0 = arith.constant 0 : i32
    return %arg0, %c0_i32 : i32, i32
  }
  func.func @transform_2(%arg0: i32) -> (i32, i32, i32) {
    %c0_i32 = arith.constant 0 : i32
    %c0_i32_0 = arith.constant 0 : i32
    %c0_i32_1 = arith.constant 0 : i32
    return %c0_i32, %arg0, %c0_i32_0 : i32, i32, i32
  }
  func.func @transform_3(%arg0: i32) -> (i32, i32, i32) {
    %c0_i32 = arith.constant 0 : i32
    %c0_i32_0 = arith.constant 0 : i32
    %c0_i32_1 = arith.constant 0 : i32
    return %c0_i32, %arg0, %c0_i32_0 : i32, i32, i32
  }
}

</mosaic_0001>

<llo_original>
// kernel: tpu_custom_call.1
$region0: #{tpu_custom_call.1}
  #allocation0 [shape = 'u32[]', space=smem, size = 0x4, offset = 0x4, fixed_abs, tag = 'smem constant byte address 0x4 - core index']
  #allocation1 [shape = 'u32[144,128]{1,0:T(1,128)}', space=vmem, size = 0x12000, scoped, tag = 'internal scratch']
  %s0 = inlined_call_operand.hbm [shape: f32[4,32], index: 0, kind: input, shape index: {}]
  %s1 = inlined_call_operand.hbm [shape: f32[4,32], index: 1, kind: input, shape index: {}]
  %s2 = inlined_call_operand.hbm [shape: f32[2,4,32], index: 2, kind: output, shape index: {0}]
  %s3 = inlined_call_operand.vmem [shape: f32[2,4,1], index: 3, kind: output, shape index: {1}]
  %4 = xla_tuple %s2, %s3
  %s5 = sld [smem:[#allocation0]]
  $region34: #{tpu_custom_call.1} parent=0
    _
  %s7 = ssub.s32 1, %s5
  %s8 = scalar_select 0, %s7, %s5
  $region1: #{tpu_custom_call.1} parent=0
    #allocation2 [shape = 'u8[2048]{0}', space=vmem, size = 0x800, scoped, tag = 'input window, operand 0, single buffered']
    #allocation3 [shape = 's32[1]{0}', space=sflag, size = 0x4, scoped, tag = 'scoped memory for tpu_custom_call.1']
    #allocation4 [shape = 's32[1]{0}', space=sflag, size = 0x4, scoped, tag = 'scoped memory for tpu_custom_call.1']
    #allocation5 [shape = 'u8[2048]{0}', space=vmem, size = 0x800, scoped, tag = 'input window, operand 1, single buffered']
    #allocation6 [shape = 's32[1]{0}', space=sflag, size = 0x4, scoped, tag = 'scoped memory for tpu_custom_call.1']
    #allocation7 [shape = 'u8[4096]{0}', space=vmem, size = 0x1000, scoped, tag = 'output window, operand 0, single buffered']
    %9 = vsyncpa [#allocation3], 0
    %10 = vsyncpa [#allocation6], 0
    %11 = vsyncpa [#allocation4], 0
    // Predicated region
    $region2: #{tpu_custom_call.1} parent=1 // pred_check
      _
    $region3: #{tpu_custom_call.1} parent=1 // pred_check_branch
      %13 = sbr.rel (0) target = $region5
    $region4: #{tpu_custom_call.1} parent=1 // pred_region
      %s15 = ssub.s32 64, 64
      %16 = vsyncadd [#allocation3], %s15
      %s18 = sshll.u32 [#allocation2], 4
      %s19 = int_to_ptr.vmem [resolvable:$true] %s18
      %21 = dma.hbm_to_vmem [thread:$0]  %s0, 64, %s19, [#allocation3]
    $region5: #{tpu_custom_call.1} parent=1 // pred_fallthru
      _
    // Predicated region
    $region6: #{tpu_custom_call.1} parent=1 // pred_check
      _
    $region7: #{tpu_custom_call.1} parent=1 // pred_check_branch
      %23 = sbr.rel (0) target = $region9
    $region8: #{tpu_custom_call.1} parent=1 // pred_region
      %s25 = ssub.s32 64, 64
      %26 = vsyncadd [#allocation6], %s25
      %s28 = sshll.u32 [#allocation5], 4
      %s29 = int_to_ptr.vmem [resolvable:$true] %s28
      %31 = dma.hbm_to_vmem [thread:$0]  %s1, 64, %s29, [#allocation6]
    $region9: #{tpu_custom_call.1} parent=1 // pred_fallthru
      _
    // Predicated region
    $region10: #{tpu_custom_call.1} parent=1 // pred_check
      _
    $region11: #{tpu_custom_call.1} parent=1 // pred_check_branch
      %33 = sbr.rel (0) target = $region13
    $region12: #{tpu_custom_call.1} parent=1 // pred_region
      %34 = dma.done [#allocation3], 64
    $region13: #{tpu_custom_call.1} parent=1 // pred_fallthru
      _
    // Predicated region
    $region14: #{tpu_custom_call.1} parent=1 // pred_check
      _
    $region15: #{tpu_custom_call.1} parent=1 // pred_check_branch
      %36 = sbr.rel (0) target = $region17
    $region16: #{tpu_custom_call.1} parent=1 // pred_region
      %37 = dma.done [#allocation6], 64
    $region17: #{tpu_custom_call.1} parent=1 // pred_fallthru
      _
    %v38 = vld [vmem:[#allocation2] sm:$0xf]
    %v39 = vmul.f32 %v38, %v38
    %vm40 = vcmask 257024
    %v41 = vsel %vm40, %v39, 0.0
    %42 = vadd.xlane.f32.xlu0 %v41
    %v43 = vpop.xlane.xlu0 %42
    %v44 = vmax.f32 %v43, 1e-24
    %v45 = vrsqrt.pop %v44
    %v46 = vmul.f32 %v38, %v45
    %v47 = vmul.f32 %v46, %v46
    %v48 = vsel %vm40, %v47, 0.0
    %49 = vadd.xlane.f32.xlu0 %v48
    %v50 = vpop.xlane.xlu0 %49
    %v51 = vld [vmem:[#allocation5] sm:$0xf]
    %v52 = vmul.f32 %v51, %v51
    %v53 = vsel %vm40, %v52, 0.0
    %54 = vadd.xlane.f32.xlu0 %v53
    %v55 = vpop.xlane.xlu0 %54
    %v56 = vmax.f32 %v55, 1e-24
    %v57 = vrsqrt.pop %v56
    %v58 = vmul.f32 %v51, %v57
    %v59 = vmul.f32 %v58, %v58
    %v60 = vsel %vm40, %v59, 0.0
    %61 = vadd.xlane.f32.xlu0 %v60
    %v62 = vpop.xlane.xlu0 %61
    %63 = vst.msk [vmem:[#allocation7] sm:$0xf] %vm40, %v46
    %s64 = scalar_lea.vmem [#allocation7], 4
    %65 = vst.msk [vmem:[%s64] sm:$0xf] %vm40, %v58
    %vm66 = vcmask 3072
    %67 = vst.msk [vmem:[%s3] sm:$0xf] %vm66, %v50
    %s68 = scalar_lea.vmem %s3, 4
    %69 = vst.msk [vmem:[%s68] sm:$0xf] %vm66, %v62
    // Predicated region
    $region18: #{tpu_custom_call.1} parent=1 // pred_check
      _
    $region19: #{tpu_custom_call.1} parent=1 // pred_check_branch
      %71 = sbr.rel (0) target = $region21
    $region20: #{tpu_custom_call.1} parent=1 // pred_region
      %s73 = ssub.s32 128, 128
      %74 = vsyncadd [#allocation4], %s73
      %s75 = sshll.u32 [#allocation7], 4
      %s76 = int_to_ptr.vmem [resolvable:$true] %s75
      %81 = dma.vmem_to_hbm [thread:$0]  %s76, 128, %s2, [#allocation4], 64, 64, 4
    $region21: #{tpu_custom_call.1} parent=1 // pred_fallthru
      _
    // Predicated region
    $region22: #{tpu_custom_call.1} parent=1 // pred_check
      _
    $region23: #{tpu_custom_call.1} parent=1 // pred_check_branch
      %83 = sbr.rel (0) target = $region25
    $region24: #{tpu_custom_call.1} parent=1 // pred_region
      _
    $region25: #{tpu_custom_call.1} parent=1 // pred_fallthru
      _
    // Predicated region
    $region26: #{tpu_custom_call.1} parent=1 // pred_check
      _
    $region27: #{tpu_custom_call.1} parent=1 // pred_check_branch
      %85 = sbr.rel (0) target = $region29
    $region28: #{tpu_custom_call.1} parent=1 // pred_region
      %86 = dma.done [#allocation4], 128
    $region29: #{tpu_custom_call.1} parent=1 // pred_fallthru
      _
    // Predicated region
    $region30: #{tpu_custom_call.1} parent=1 // pred_check
      _
    $region31: #{tpu_custom_call.1} parent=1 // pred_check_branch
      %88 = sbr.rel (0) target = $region33
    $region32: #{tpu_custom_call.1} parent=1 // pred_region
      _
    $region33: #{tpu_custom_call.1} parent=1 // pred_fallthru
      _
    %89 = vsyncpa [#allocation3], 1
    %90 = vsyncpa [#allocation6], 1
    %91 = vsyncpa [#allocation4], 1

</llo_original>
